<compile_context>
chip_gen: v7x
topology: tpu7x:2x2x1
jax: 0.10.0
libtpu: 0.0.40
codegen_flags: <defaults>
</compile_context>

<pallas_src>
import functools

import jax
import jax.numpy as jnp
from jax.experimental import pallas as pl
from jax.experimental.pallas import tpu as pltpu

SUBLANE = 8  # f32 vreg sublane height (second-last dim)


def policy_net_kernel(x_ref, w1_ref, b1_ref, w2_ref, b2_ref, out_ref, *, action_bound):
    # fc1 + ReLU  (MXU dot, VPU bias add / max)
    h = jnp.dot(x_ref[...], w1_ref[...], preferred_element_type=jnp.float32)
    h = jnp.maximum(h + b1_ref[...], 0.0)            # (TB, H) + (1, H) broadcast
    # fc2 + tanh * action_bound  (MXU dot, EUP tanh)
    y = jnp.dot(h, w2_ref[...], preferred_element_type=jnp.float32)
    y = y + b2_ref[...]                              # (TB, A) + (1, A) broadcast
    out_ref[...] = (jnp.tanh(y) * action_bound).astype(out_ref.dtype)


def policy_net_forward(x, w1, b1, w2, b2, action_bound, *, batch_tile=1024):
    B, S = x.shape
    H = w1.shape[1]
    A = w2.shape[1]

    x = jnp.asarray(x, jnp.float32)
    w1 = jnp.asarray(w1, jnp.float32)
    b1 = jnp.asarray(b1, jnp.float32).reshape(1, H)
    w2 = jnp.asarray(w2, jnp.float32)
    b2 = jnp.asarray(b2, jnp.float32).reshape(1, A)

    # Batch tile: whole batch if it is small (block dim == full dim is always legal),
    # otherwise a sublane-aligned streaming tile; ragged last tile handled by Pallas.
    TB = B if B <= batch_tile else batch_tile
    assert TB == B or TB % SUBLANE == 0
    grid = (pl.cdiv(B, TB),)

    kernel = functools.partial(policy_net_kernel, action_bound=float(action_bound))

    cost = pl.CostEstimate(
        flops=2 * B * (S * H + H * A),
        transcendentals=B * A,
        bytes_accessed=4 * (B * S + S * H + H + H * A + A + B * A),
    )

    return pl.pallas_call(
        kernel,
        out_shape=jax.ShapeDtypeStruct((B, A), jnp.float32),
        grid=grid,
        in_specs=[
            pl.BlockSpec((TB, S), lambda i: (i, 0)),   # x: streamed per batch tile
            pl.BlockSpec((S, H), lambda i: (0, 0)),    # W1: VMEM-resident
            pl.BlockSpec((1, H), lambda i: (0, 0)),    # b1: VMEM-resident
            pl.BlockSpec((H, A), lambda i: (0, 0)),    # W2: VMEM-resident
            pl.BlockSpec((1, A), lambda i: (0, 0)),    # b2: VMEM-resident
        ],
        out_specs=pl.BlockSpec((TB, A), lambda i: (i, 0)),
        compiler_params=pltpu.CompilerParams(
            dimension_semantics=("parallel",),         # megacore on v7x
            vmem_limit_bytes=32 * 1024 * 1024,         # safe on v5e/v6e/v7x
        ),
        cost_estimate=cost,
    )(x, w1, b1, w2, b2)


def init_params(key, state_dim, hidden_dim, action_dim):
    # Deterministic synthetic init (uniform, PyTorch-Linear-like bounds).
    k1, k2, k3, k4 = jax.random.split(key, 4)
    bound1 = 1.0 / (state_dim ** 0.5)
    bound2 = 1.0 / (hidden_dim ** 0.5)
    w1 = jax.random.uniform(k1, (state_dim, hidden_dim), jnp.float32, -bound1, bound1)
    b1 = jax.random.uniform(k2, (1, hidden_dim), jnp.float32, -bound1, bound1)
    w2 = jax.random.uniform(k3, (hidden_dim, action_dim), jnp.float32, -bound2, bound2)
    b2 = jax.random.uniform(k4, (1, action_dim), jnp.float32, -bound2, bound2)
    return w1, b1, w2, b2


def _reference(x, w1, b1, w2, b2, action_bound):
    return jnp.tanh(jnp.maximum(x @ w1 + b1, 0.0) @ w2 + b2) * action_bound


if __name__ == "__main__":
    state_dim, hidden_dim, action_dim = 4, 32, 2
    action_bound = 2.0

    key = jax.random.PRNGKey(0)
    kx, kp, kx2 = jax.random.split(key, 3)
    w1, b1, w2, b2 = init_params(kp, state_dim, hidden_dim, action_dim)

    # Small batch: single grid step, whole-array blocks, no padding anywhere.
    batch = 2
    x = jax.random.normal(kx, (batch, state_dim), jnp.float32)
    out = jax.block_until_ready(policy_net_forward(x, w1, b1, w2, b2, action_bound))
    ref = _reference(x, w1, b1, w2, b2, action_bound)
    assert out.shape == (batch, action_dim)
    assert jnp.allclose(out, ref, atol=1e-5), "mismatch vs reference (small batch)"

    # Larger, non-divisible batch: exercises the streamed, ragged-last-tile grid path.
    batch2 = 50
    x2 = jax.random.normal(kx2, (batch2, state_dim), jnp.float32)
    out2 = jax.block_until_ready(
        policy_net_forward(x2, w1, b1, w2, b2, action_bound, batch_tile=16)
    )
    ref2 = _reference(x2, w1, b1, w2, b2, action_bound)
    assert out2.shape == (batch2, action_dim)
    assert jnp.allclose(out2, ref2, atol=1e-5), "mismatch vs reference (tiled batch)"

    print("KERNEL_OK")
</pallas_src>

<mosaic_0001>
module attributes {stable_mosaic.version = 11 : i64} {
  func.func @policy_net_kernel(%arg0: i32, %arg1: memref<2x4xf32, #tpu.memory_space<vmem>>, %arg2: memref<4x32xf32, #tpu.memory_space<vmem>>, %arg3: memref<1x32xf32, #tpu.memory_space<vmem>>, %arg4: memref<32x2xf32, #tpu.memory_space<vmem>>, %arg5: memref<1x2xf32, #tpu.memory_space<vmem>>, %arg6: memref<2x2xf32, #tpu.memory_space<vmem>>) attributes {dimension_semantics = [#tpu.dimension_semantics<parallel>], iteration_bounds = array<i64: 1>, scalar_prefetch = 0 : i64, scratch_operands = 0 : i64, tpu.core_type = #tpu.core_type<tc>, window_params = [{transform_indices = @transform_0, window_bounds = array<i64: 2, 4>}, {pipeline_mode = #tpu.pipeline_mode<synchronous>, transform_indices = @transform_1, window_bounds = array<i64: 4, 32>}, {pipeline_mode = #tpu.pipeline_mode<synchronous>, transform_indices = @transform_2, window_bounds = array<i64: 1, 32>}, {pipeline_mode = #tpu.pipeline_mode<synchronous>, transform_indices = @transform_3, window_bounds = array<i64: 32, 2>}, {pipeline_mode = #tpu.pipeline_mode<synchronous>, transform_indices = @transform_4, window_bounds = array<i64: 1, 2>}, {transform_indices = @transform_5, window_bounds = array<i64: 2, 2>}]} {
    %c0 = arith.constant 0 : index
    %c0_0 = arith.constant 0 : index
    %0 = vector.load %arg1[%c0, %c0_0] : memref<2x4xf32, #tpu.memory_space<vmem>>, vector<2x4xf32>
    %c0_1 = arith.constant 0 : index
    %c0_2 = arith.constant 0 : index
    %1 = vector.load %arg2[%c0_1, %c0_2] : memref<4x32xf32, #tpu.memory_space<vmem>>, vector<4x32xf32>
    %cst = arith.constant dense<0.000000e+00> : vector<2x32xf32>
    %2 = tpu.matmul %0, %1, %cst {dimension_numbers = #tpu.dot_dimension_numbers<[1], [0], [0], [1], [0, 0, 1, 1], [], []>} : vector<2x4xf32>, vector<4x32xf32>, vector<2x32xf32> -> vector<2x32xf32>
    %c0_3 = arith.constant 0 : index
    %c0_4 = arith.constant 0 : index
    %3 = vector.load %arg3[%c0_3, %c0_4] : memref<1x32xf32, #tpu.memory_space<vmem>>, vector<1x32xf32>
    %4 = vector.broadcast %3 : vector<1x32xf32> to vector<2x32xf32>
    %5 = arith.addf %2, %4 : vector<2x32xf32>
    %cst_5 = arith.constant 0.000000e+00 : f32
    %6 = vector.broadcast %cst_5 : f32 to vector<2x32xf32>
    %7 = arith.maximumf %5, %6 : vector<2x32xf32>
    %c0_6 = arith.constant 0 : index
    %c0_7 = arith.constant 0 : index
    %8 = vector.load %arg4[%c0_6, %c0_7] : memref<32x2xf32, #tpu.memory_space<vmem>>, vector<32x2xf32>
    %cst_8 = arith.constant dense<0.000000e+00> : vector<2x2xf32>
    %9 = tpu.matmul %7, %8, %cst_8 {dimension_numbers = #tpu.dot_dimension_numbers<[1], [0], [0], [1], [0, 0, 1, 1], [], []>} : vector<2x32xf32>, vector<32x2xf32>, vector<2x2xf32> -> vector<2x2xf32>
    %c0_9 = arith.constant 0 : index
    %c0_10 = arith.constant 0 : index
    %10 = vector.load %arg5[%c0_9, %c0_10] : memref<1x2xf32, #tpu.memory_space<vmem>>, vector<1x2xf32>
    %11 = vector.broadcast %10 : vector<1x2xf32> to vector<2x2xf32>
    %12 = arith.addf %9, %11 : vector<2x2xf32>
    %13 = math.tanh %12 : vector<2x2xf32>
    %cst_11 = arith.constant 2.000000e+00 : f32
    %14 = vector.broadcast %cst_11 : f32 to vector<2x2xf32>
    %15 = arith.mulf %13, %14 : vector<2x2xf32>
    %c0_12 = arith.constant 0 : index
    %c0_13 = arith.constant 0 : index
    %16 = vector.load %arg6[%c0_12, %c0_13] : memref<2x2xf32, #tpu.memory_space<vmem>>, vector<2x2xf32>
    tpu.vector_store %arg6[%c0_12, %c0_13], %15 {strides = array<i32>} : memref<2x2xf32, #tpu.memory_space<vmem>>, vector<2x2xf32>,
    return
  }
  func.func @transform_0(%arg0: i32) -> (i32, i32) {
    %c0_i32 = arith.constant 0 : i32
    %c0_i32_0 = arith.constant 0 : i32
    return %arg0, %c0_i32 : i32, i32
  }
  func.func @transform_1(%arg0: i32) -> (i32, i32) {
    %c0_i32 = arith.constant 0 : i32
    %c0_i32_0 = arith.constant 0 : i32
    %c0_i32_1 = arith.constant 0 : i32
    return %c0_i32, %c0_i32_0 : i32, i32
  }
  func.func @transform_2(%arg0: i32) -> (i32, i32) {
    %c0_i32 = arith.constant 0 : i32
    %c0_i32_0 = arith.constant 0 : i32
    %c0_i32_1 = arith.constant 0 : i32
    return %c0_i32, %c0_i32_0 : i32, i32
  }
  func.func @transform_3(%arg0: i32) -> (i32, i32) {
    %c0_i32 = arith.constant 0 : i32
    %c0_i32_0 = arith.constant 0 : i32
    %c0_i32_1 = arith.constant 0 : i32
    return %c0_i32, %c0_i32_0 : i32, i32
  }
  func.func @transform_4(%arg0: i32) -> (i32, i32) {
    %c0_i32 = arith.constant 0 : i32
    %c0_i32_0 = arith.constant 0 : i32
    %c0_i32_1 = arith.constant 0 : i32
    return %c0_i32, %c0_i32_0 : i32, i32
  }
  func.func @transform_5(%arg0: i32) -> (i32, i32) {
    %c0_i32 = arith.constant 0 : i32
    %c0_i32_0 = arith.constant 0 : i32
    return %arg0, %c0_i32 : i32, i32
  }
}

</mosaic_0001>

<llo_original>
// kernel: tpu_custom_call.1
$region0: #{tpu_custom_call.1}
  #allocation0 [shape = 'u32[]', space=smem, size = 0x4, offset = 0x4, fixed_abs, tag = 'smem constant byte address 0x4 - core index']
  #allocation1 [shape = 'u32[144,128]{1,0:T(1,128)}', space=vmem, size = 0x12000, scoped, tag = 'internal scratch']
  %s0 = inlined_call_operand.vmem [shape: f32[2,4], index: 0, kind: input, shape index: {}]
  %s1 = inlined_call_operand.vmem [shape: f32[4,32], index: 1, kind: input, shape index: {}]
  %s2 = inlined_call_operand.vmem [shape: f32[1,32], index: 2, kind: input, shape index: {}]
  %s3 = inlined_call_operand.vmem [shape: f32[32,2], index: 3, kind: input, shape index: {}]
  %s4 = inlined_call_operand.vmem [shape: f32[1,2], index: 4, kind: input, shape index: {}]
  %s5 = inlined_call_operand.hbm [shape: f32[2,2], index: 5, kind: output, shape index: {}]
  %s6 = sld [smem:[#allocation0]]
  $region30: #{tpu_custom_call.1} parent=0
    _
  %s8 = ssub.s32 1, %s6
  %s9 = scalar_select 0, %s8, %s6
  $region1: #{tpu_custom_call.1} parent=0
    #allocation2 [shape = 'u8[1024]{0}', space=vmem, size = 0x400, scoped, tag = 'output window, operand 0, single buffered']
    #allocation3 [shape = 's32[1]{0}', space=sflag, size = 0x4, scoped, tag = 'scoped memory for tpu_custom_call.1']
    %10 = vsyncpa [#allocation3], 0
    // Predicated region
    $region2: #{tpu_custom_call.1} parent=1 // pred_check
      _
    $region3: #{tpu_custom_call.1} parent=1 // pred_check_branch
      %12 = sbr.rel (0) target = $region5
    $region4: #{tpu_custom_call.1} parent=1 // pred_region
      _
    $region5: #{tpu_custom_call.1} parent=1 // pred_fallthru
      _
    // Predicated region
    $region6: #{tpu_custom_call.1} parent=1 // pred_check
      _
    $region7: #{tpu_custom_call.1} parent=1 // pred_check_branch
      %14 = sbr.rel (0) target = $region9
    $region8: #{tpu_custom_call.1} parent=1 // pred_region
      _
    $region9: #{tpu_custom_call.1} parent=1 // pred_fallthru
      _
    // Predicated region
    $region10: #{tpu_custom_call.1} parent=1 // pred_check
      _
    $region11: #{tpu_custom_call.1} parent=1 // pred_check_branch
      %16 = sbr.rel (0) target = $region13
    $region12: #{tpu_custom_call.1} parent=1 // pred_region
      _
    $region13: #{tpu_custom_call.1} parent=1 // pred_fallthru
      _
    // Predicated region
    $region14: #{tpu_custom_call.1} parent=1 // pred_check
      _
    $region15: #{tpu_custom_call.1} parent=1 // pred_check_branch
      %18 = sbr.rel (0) target = $region17
    $region16: #{tpu_custom_call.1} parent=1 // pred_region
      _
    $region17: #{tpu_custom_call.1} parent=1 // pred_fallthru
      _
    // Predicated region
    $region18: #{tpu_custom_call.1} parent=1 // pred_check
      _
    $region19: #{tpu_custom_call.1} parent=1 // pred_check_branch
      %20 = sbr.rel (0) target = $region21
    $region20: #{tpu_custom_call.1} parent=1 // pred_region
      _
    $region21: #{tpu_custom_call.1} parent=1 // pred_fallthru
      _
    %v21 = vld [vmem:[%s0] sm:$0x3]
    %v22 = vld [vmem:[%s1] sm:$0xf]
    %v23 = vld [vmem:[%s2] sm:$0x1]
    %v25 = vlaneseq
    %v26 = vshrl.u32 %v25, 7
    %v27 = vsub.s32 0, %v26
    %v28 = vrot.slane %v23, %v27
    %vm30 = vcmask 31744
    %v32 = vsel %vm30, %v21, 0
    %vm34 = vcmask 1043456
    %v36 = vsel %vm34, %v22, 0
    %38 = vmatprep.subr.mxu0 0.0
    %39 = vmatpush1.msra.mxu0 %v36
    %40 = vmatprep.subr.mxu0 0.0
    %41 = vmatpush1.msra.mxu0 0.0
    %42 = vmatprep.subr.mxu0 0.0
    %43 = vmatpush1.msra.mxu0 0.0
    %44 = vmatprep.subr.mxu0 0.0
    %45 = vmatpush1.msra.mxu0 0.0
    %46 = vmatprep.subr.mxu0 0.0
    %47 = vmatpush1.msra.mxu0 0.0
    %48 = vmatprep.subr.mxu0 0.0
    %49 = vmatpush1.msra.mxu0 0.0
    %50 = vmatprep.subr.mxu0 0.0
    %51 = vmatpush1.msra.mxu0 0.0
    %52 = vmatprep.subr.mxu0 0.0
    %53 = vmatpush1.msra.mxu0 0.0
    %54 = vmatprep.subr.mxu0 0.0
    %55 = vmatpush1.msra.mxu0 0.0
    %56 = vmatprep.subr.mxu0 0.0
    %57 = vmatpush1.msra.mxu0 0.0
    %58 = vmatprep.subr.mxu0 0.0
    %59 = vmatpush1.msra.mxu0 0.0
    %60 = vmatprep.subr.mxu0 0.0
    %61 = vmatpush1.msra.mxu0 0.0
    %62 = vmatprep.subr.mxu0 0.0
    %63 = vmatpush1.msra.mxu0 0.0
    %64 = vmatprep.subr.mxu0 0.0
    %65 = vmatpush1.msra.mxu0 0.0
    %66 = vmatprep.subr.mxu0 0.0
    %67 = vmatpush1.msra.mxu0 0.0
    %68 = vmatprep.subr.mxu0 0.0
    %69 = vmatpush1.msra.mxu0 0.0
    %70 = vmatprep.subr.mxu0 0.0
    %71 = vmatpush1.msra.mxu0 0.0
    %72 = vmatprep.subr.mxu0 0.0
    %73 = vmatpush1.msra.mxu0 0.0
    %74 = vmatprep.subr.mxu0 0.0
    %75 = vmatpush1.msra.mxu0 0.0
    %76 = vmatprep.subr.mxu0 0.0
    %77 = vmatpush1.msra.mxu0 0.0
    %78 = vmatprep.subr.mxu0 0.0
    %79 = vmatpush1.msra.mxu0 0.0
    %80 = vmatprep.subr.mxu0 0.0
    %81 = vmatpush1.msra.mxu0 0.0
    %82 = vmatprep.subr.mxu0 0.0
    %83 = vmatpush1.msra.mxu0 0.0
    %84 = vmatprep.subr.mxu0 0.0
    %85 = vmatpush1.msra.mxu0 0.0
    %86 = vmatprep.subr.mxu0 0.0
    %87 = vmatpush1.msra.mxu0 0.0
    %88 = vmatprep.subr.mxu0 0.0
    %89 = vmatpush1.msra.mxu0 0.0
    %90 = vmatprep.subr.mxu0 0.0
    %91 = vmatpush1.msra.mxu0 0.0
    %92 = vmatprep.subr.mxu0 0.0
    %93 = vmatpush1.msra.mxu0 0.0
    %94 = vmatprep.subr.mxu0 0.0
    %95 = vmatpush1.msra.mxu0 0.0
    %96 = vmatprep.subr.mxu0 0.0
    %97 = vmatpush1.msra.mxu0 0.0
    %98 = vmatprep.subr.mxu0 0.0
    %99 = vmatpush1.msra.mxu0 0.0
    %100 = vmatprep.subr.mxu0 0.0
    %101 = vmatpush1.msra.mxu0 0.0
    %102 = vmatprep.mubr.f32.mxu0 0.0
    %103 = vmatmul.mubr.f32.gmra.mrb[0].mxu0 %v32
    %v104 = vpop.f32.mrb[0].mxu0
    %v105 = vadd.f32 %v28, %v104
    %v106 = vpop.f32.mrb[0].mxu0
    %107 = vdwg.mxu0
    %v108 = vmax.f32 %v105, 0.0
    %v109 = vld [vmem:[%s3] sm:$0xff]
    %v110 = vld [vmem:[%s3 + $0x8] sm:$0xff]
    %v111 = vld [vmem:[%s3 + $0x10] sm:$0xff]
    %v112 = vld [vmem:[%s3 + $0x18] sm:$0xff]
    %v113 = vld [vmem:[%s4] sm:$0x1]
    %v115 = vlaneseq
    %v116 = vshrl.u32 %v115, 7
    %v117 = vsub.s32 0, %v116
    %v118 = vrot.slane %v113, %v117
    %vm120 = vcmask 261120
    %v122 = vsel %vm120, %v108, 0
    %124 = vmatprep.subr.mxu0 0.0
    %125 = vmatpush1.msra.mxu0 %v109
    %126 = vmatprep.subr.mxu0 0.0
    %127 = vmatpush1.msra.mxu0 %v110
    %128 = vmatprep.subr.mxu0 0.0
    %129 = vmatpush1.msra.mxu0 %v111
    %130 = vmatprep.subr.mxu0 0.0
    %131 = vmatpush1.msra.mxu0 %v112
    %132 = vmatprep.subr.mxu0 0.0
    %133 = vmatpush1.msra.mxu0 0.0
    %134 = vmatprep.subr.mxu0 0.0
    %135 = vmatpush1.msra.mxu0 0.0
    %136 = vmatprep.subr.mxu0 0.0
    %137 = vmatpush1.msra.mxu0 0.0
    %138 = vmatprep.subr.mxu0 0.0
    %139 = vmatpush1.msra.mxu0 0.0
    %140 = vmatprep.subr.mxu0 0.0
    %141 = vmatpush1.msra.mxu0 0.0
    %142 = vmatprep.subr.mxu0 0.0
    %143 = vmatpush1.msra.mxu0 0.0
    %144 = vmatprep.subr.mxu0 0.0
    %145 = vmatpush1.msra.mxu0 0.0
    %146 = vmatprep.subr.mxu0 0.0
    %147 = vmatpush1.msra.mxu0 0.0
    %148 = vmatprep.subr.mxu0 0.0
    %149 = vmatpush1.msra.mxu0 0.0
    %150 = vmatprep.subr.mxu0 0.0
    %151 = vmatpush1.msra.mxu0 0.0
    %152 = vmatprep.subr.mxu0 0.0
    %153 = vmatpush1.msra.mxu0 0.0
    %154 = vmatprep.subr.mxu0 0.0
    %155 = vmatpush1.msra.mxu0 0.0
    %156 = vmatprep.subr.mxu0 0.0
    %157 = vmatpush1.msra.mxu0 0.0
    %158 = vmatprep.subr.mxu0 0.0
    %159 = vmatpush1.msra.mxu0 0.0
    %160 = vmatprep.subr.mxu0 0.0
    %161 = vmatpush1.msra.mxu0 0.0
    %162 = vmatprep.subr.mxu0 0.0
    %163 = vmatpush1.msra.mxu0 0.0
    %164 = vmatprep.subr.mxu0 0.0
    %165 = vmatpush1.msra.mxu0 0.0
    %166 = vmatprep.subr.mxu0 0.0
    %167 = vmatpush1.msra.mxu0 0.0
    %168 = vmatprep.subr.mxu0 0.0
    %169 = vmatpush1.msra.mxu0 0.0
    %170 = vmatprep.subr.mxu0 0.0
    %171 = vmatpush1.msra.mxu0 0.0
    %172 = vmatprep.subr.mxu0 0.0
    %173 = vmatpush1.msra.mxu0 0.0
    %174 = vmatprep.subr.mxu0 0.0
    %175 = vmatpush1.msra.mxu0 0.0
    %176 = vmatprep.subr.mxu0 0.0
    %177 = vmatpush1.msra.mxu0 0.0
    %178 = vmatprep.subr.mxu0 0.0
    %179 = vmatpush1.msra.mxu0 0.0
    %180 = vmatprep.subr.mxu0 0.0
    %181 = vmatpush1.msra.mxu0 0.0
    %182 = vmatprep.subr.mxu0 0.0
    %183 = vmatpush1.msra.mxu0 0.0
    %184 = vmatprep.subr.mxu0 0.0
    %185 = vmatpush1.msra.mxu0 0.0
    %186 = vmatprep.subr.mxu0 0.0
    %187 = vmatpush1.msra.mxu0 0.0
    %188 = vmatprep.mubr.f32.mxu0 0.0
    %189 = vmatmul.mubr.f32.gmra.mrb[0].mxu0 %v122
    %v190 = vpop.f32.mrb[0].mxu0
    %v191 = vadd.f32 %v118, %v190
    %v192 = vpop.f32.mrb[0].mxu0
    %193 = vdwg.mxu0
    %v194 = vtanh.pop %v191
    %v195 = vmul.f32 %v194, 2.0
    %vm196 = vcmask 9216
    %197 = vst.msk [vmem:[#allocation2] sm:$0x3] %vm196, %v195
    // Predicated region
    $region22: #{tpu_custom_call.1} parent=1 // pred_check
      _
    $region23: #{tpu_custom_call.1} parent=1 // pred_check_branch
      %199 = sbr.rel (0) target = $region25
    $region24: #{tpu_custom_call.1} parent=1 // pred_region
      %s201 = ssub.s32 32, 32
      %202 = vsyncadd [#allocation3], %s201
      %s204 = sshll.u32 [#allocation2], 4
      %s205 = int_to_ptr.vmem [resolvable:$true] %s204
      %207 = dma.vmem_to_hbm [thread:$0]  %s205, 32, %s5, [#allocation3]
    $region25: #{tpu_custom_call.1} parent=1 // pred_fallthru
      _
    // Predicated region
    $region26: #{tpu_custom_call.1} parent=1 // pred_check
      _
    $region27: #{tpu_custom_call.1} parent=1 // pred_check_branch
      %209 = sbr.rel (0) target = $region29
    $region28: #{tpu_custom_call.1} parent=1 // pred_region
      %210 = dma.done [#allocation3], 32
    $region29: #{tpu_custom_call.1} parent=1 // pred_fallthru
      _
    %211 = vsyncpa [#allocation3], 1

</llo_original>
